<compile_context>
chip_gen: v7x
topology: tpu7x:2x2x1
jax: 0.10.0
libtpu: 0.0.40
codegen_flags: <defaults>
</compile_context>

<pallas_src>
import jax
import jax.numpy as jnp
from jax.experimental import pallas as pl
from jax.experimental.pallas import tpu as pltpu


def _round_up(n: int, m: int) -> int:
    return ((n + m - 1) // m) * m


def _param_layout(state_dim, hidden_layers_dim, action_dim):
    """Static row offsets for the packed (rows, width) parameter buffer."""
    h1, h2 = hidden_layers_dim
    a_pad = _round_up(max(action_dim, 1), 128)          # lane-dense header width
    width = _round_up(max(h1, h2, a_pad), 128)
    off = {}
    row = 0
    # 8-row alignment for every segment (weights AND biases) -> tile-aligned
    # slices inside the kernel, no mid-sublane-tile bias extraction.
    for name, nrows in (("w1", state_dim), ("w2", h1), ("wh", h2),
                        ("b1", 1), ("b2", 1), ("bh", 1)):
        off[name] = row
        row = _round_up(row + nrows, 8)
    rows = _round_up(row, 8)
    return off, rows, width, a_pad


def pack_params(params, state_dim, hidden_layers_dim, action_dim):
    """Pack w1,b1,w2,b2,wh,bh into one zero-padded f32 buffer (single DMA)."""
    off, rows, width, _ = _param_layout(state_dim, hidden_layers_dim, action_dim)
    buf = jnp.zeros((rows, width), jnp.float32)
    for name in ("w1", "w2", "wh", "b1", "b2", "bh"):
        arr = params[name].astype(jnp.float32)
        r, c = arr.shape
        buf = buf.at[off[name]:off[name] + r, :c].set(arr)
    return buf


def make_policy_net_forward(state_dim, hidden_layers_dim, action_dim):
    """Build a fused forward: (batch, state_dim) f32 -> (batch, action_dim) probs."""
    assert len(hidden_layers_dim) == 2, "example network has two hidden layers"
    h1, h2 = hidden_layers_dim
    off, p_rows, p_width, a_pad = _param_layout(state_dim, hidden_layers_dim,
                                                action_dim)

    def kernel(x_ref, p_ref, o_ref):
        x = x_ref[...]                                          # (TB, S)
        # hidden layer 1: linear + ReLU
        w1 = p_ref[off["w1"]:off["w1"] + state_dim, :h1]        # (S, H1)
        b1 = p_ref[off["b1"]:off["b1"] + 1, :h1]                # (1, H1)
        h = jnp.maximum(
            jnp.dot(x, w1, preferred_element_type=jnp.float32) + b1, 0.0)
        # hidden layer 2: linear + ReLU
        w2 = p_ref[off["w2"]:off["w2"] + h1, :h2]               # (H1, H2)
        b2 = p_ref[off["b2"]:off["b2"] + 1, :h2]                # (1, H2)
        h = jnp.maximum(
            jnp.dot(h, w2, preferred_element_type=jnp.float32) + b2, 0.0)
        # header linear at the lane-dense (128-padded) action width
        wh = p_ref[off["wh"]:off["wh"] + h2, :a_pad]            # (H2, A_pad)
        bh = p_ref[off["bh"]:off["bh"] + 1, :a_pad]             # (1, A_pad)
        logits = jnp.dot(h, wh, preferred_element_type=jnp.float32) + bh
        # mask the padded action lanes so they get probability exactly 0
        lane = jax.lax.broadcasted_iota(jnp.int32, logits.shape, 1)
        logits = jnp.where(lane < action_dim, logits, jnp.float32(-1e30))
        # softmax over the action dim (== F.softmax(x) on a 2D tensor, dim=1)
        m = jnp.max(logits, axis=-1, keepdims=True)
        e = jnp.exp(logits - m)
        probs = e / jnp.sum(e, axis=-1, keepdims=True)          # exact divide
        o_ref[...] = probs.astype(o_ref.dtype)
        # TODO(synk): action sampling / log-prob could be fused here
        # (pltpu.prng_seed + prng_random_bits) to remove a second device op,
        # but the spec's forward() returns the probability rows.

    def forward(x, packed_params):
        batch = x.shape[0]
        b8 = _round_up(max(batch, 1), 8)
        # Single tile for any realistic rollout (<= a few thousand rows);
        # exactly two balanced tiles for very large batches so a v7x megacore
        # can shard them (dimension_semantics=("parallel",)). Grid steps cost
        # ~0.35 us each, so fewer is better on a launch-bound microkernel.
        num_tiles = 1 if b8 <= 2048 else 2
        tb = _round_up((b8 + num_tiles - 1) // num_tiles, 8)
        b_pad = tb * num_tiles
        if b_pad != batch:
            x = jnp.pad(x, ((0, b_pad - batch), (0, 0)))
        grid = (num_tiles,)

        flops = 2 * b_pad * (state_dim * h1 + h1 * h2 + h2 * action_dim)
        cost = pl.CostEstimate(
            flops=flops,
            transcendentals=b_pad * a_pad,                  # exp
            bytes_accessed=(x.size + packed_params.size + b_pad * a_pad) * 4)

        out = pl.pallas_call(
            kernel,
            out_shape=jax.ShapeDtypeStruct((b_pad, a_pad), jnp.float32),
            grid=grid,
            in_specs=[
                # batch tile(s) of x
                pl.BlockSpec((tb, state_dim), lambda i: (i, 0)),
                # packed params: constant block index -> 1 DMA, VMEM-resident
                pl.BlockSpec((p_rows, p_width), lambda i: (0, 0)),
            ],
            out_specs=pl.BlockSpec((tb, a_pad), lambda i: (i, 0)),
            compiler_params=pltpu.CompilerParams(
                dimension_semantics=("parallel",)),
            cost_estimate=cost,
        )(x, packed_params)
        return out[:batch, :action_dim]

    return jax.jit(forward)


def init_params(key, state_dim, hidden_layers_dim, action_dim):
    """torch.nn.Linear-style init (uniform +-1/sqrt(fan_in)).
    Weights stored (in, out); biases (1, out) for 2D broadcasting."""
    dims = [state_dim] + list(hidden_layers_dim) + [action_dim]
    names = [("w1", "b1"), ("w2", "b2"), ("wh", "bh")]
    params = {}
    for (wn, bn), fan_in, fan_out in zip(names, dims[:-1], dims[1:]):
        key, kw, kb = jax.random.split(key, 3)
        bound = 1.0 / jnp.sqrt(fan_in)
        params[wn] = jax.random.uniform(kw, (fan_in, fan_out), jnp.float32,
                                        -bound, bound)
        params[bn] = jax.random.uniform(kb, (1, fan_out), jnp.float32,
                                        -bound, bound)
    return params


def _reference_forward(x, params):
    h = jnp.maximum(x @ params["w1"] + params["b1"], 0.0)
    h = jnp.maximum(h @ params["w2"] + params["b2"], 0.0)
    logits = h @ params["wh"] + params["bh"]
    return jax.nn.softmax(logits, axis=-1)


# TODO(synk): model_compelete/update (MSELoss + Adam training step) are training
# utilities outside the forward pass and are not translated to Pallas.

if __name__ == "__main__":
    state_dim = 4              # CartPole-v0 observation dim
    hidden_layers_dim = [32, 32]
    action_dim = 2             # CartPole-v0 actions

    key = jax.random.PRNGKey(0)
    key, k_small, k_big = jax.random.split(key, 3)
    params = init_params(key, state_dim, hidden_layers_dim, action_dim)
    packed = pack_params(params, state_dim, hidden_layers_dim, action_dim)

    forward = make_policy_net_forward(state_dim, hidden_layers_dim, action_dim)

    # (1) tiny per-env-step batch (single grid step, no padding)
    # (2) rollout-sized, non-multiple-of-8 batch (single grid step + padding)
    for kx, batch in ((k_small, 8), (k_big, 260)):
        x = jax.random.normal(kx, (batch, state_dim), jnp.float32)
        out = jax.block_until_ready(forward(x, packed))
        ref = _reference_forward(x, params)
        assert out.shape == (batch, action_dim)
        err = float(jnp.max(jnp.abs(out - ref)))
        assert jnp.allclose(out, ref, atol=1e-4, rtol=1e-4), \
            f"mismatch at batch={batch}: max err {err}"
        assert jnp.allclose(jnp.sum(out, axis=-1), 1.0, atol=1e-5), \
            f"rows not normalized at batch={batch}"

    print("KERNEL_OK")
</pallas_src>

<mosaic_0001>
module attributes {stable_mosaic.version = 11 : i64} {
  func.func @kernel(%arg0: i32, %arg1: memref<8x4xf32, #tpu.memory_space<vmem>>, %arg2: memref<96x128xf32, #tpu.memory_space<vmem>>, %arg3: memref<8x128xf32, #tpu.memory_space<vmem>>) attributes {dimension_semantics = [#tpu.dimension_semantics<parallel>], iteration_bounds = array<i64: 1>, scalar_prefetch = 0 : i64, scratch_operands = 0 : i64, tpu.core_type = #tpu.core_type<tc>, window_params = [{transform_indices = @transform_0, window_bounds = array<i64: 8, 4>}, {pipeline_mode = #tpu.pipeline_mode<synchronous>, transform_indices = @transform_1, window_bounds = array<i64: 96, 128>}, {transform_indices = @transform_2, window_bounds = array<i64: 8, 128>}]} {
    %c0 = arith.constant 0 : index
    %c0_0 = arith.constant 0 : index
    %0 = vector.load %arg1[%c0, %c0_0] : memref<8x4xf32, #tpu.memory_space<vmem>>, vector<8x4xf32>
    %c0_1 = arith.constant 0 : index
    %c0_2 = arith.constant 0 : index
    %1 = vector.load %arg2[%c0_1, %c0_2] : memref<96x128xf32, #tpu.memory_space<vmem>>, vector<4x32xf32>
    %c72 = arith.constant 72 : index
    %c0_3 = arith.constant 0 : index
    %2 = vector.load %arg2[%c72, %c0_3] : memref<96x128xf32, #tpu.memory_space<vmem>>, vector<1x32xf32>
    %cst = arith.constant dense<0.000000e+00> : vector<8x32xf32>
    %3 = tpu.matmul %0, %1, %cst {dimension_numbers = #tpu.dot_dimension_numbers<[1], [0], [0], [1], [0, 0, 1, 1], [], []>} : vector<8x4xf32>, vector<4x32xf32>, vector<8x32xf32> -> vector<8x32xf32>
    %4 = vector.broadcast %2 : vector<1x32xf32> to vector<8x32xf32>
    %5 = arith.addf %3, %4 : vector<8x32xf32>
    %cst_4 = arith.constant 0.000000e+00 : f32
    %6 = vector.broadcast %cst_4 : f32 to vector<8x32xf32>
    %7 = arith.maximumf %5, %6 : vector<8x32xf32>
    %c8 = arith.constant 8 : index
    %c0_5 = arith.constant 0 : index
    %8 = vector.load %arg2[%c8, %c0_5] : memref<96x128xf32, #tpu.memory_space<vmem>>, vector<32x32xf32>
    %c80 = arith.constant 80 : index
    %c0_6 = arith.constant 0 : index
    %9 = vector.load %arg2[%c80, %c0_6] : memref<96x128xf32, #tpu.memory_space<vmem>>, vector<1x32xf32>
    %cst_7 = arith.constant dense<0.000000e+00> : vector<8x32xf32>
    %10 = tpu.matmul %7, %8, %cst_7 {dimension_numbers = #tpu.dot_dimension_numbers<[1], [0], [0], [1], [0, 0, 1, 1], [], []>} : vector<8x32xf32>, vector<32x32xf32>, vector<8x32xf32> -> vector<8x32xf32>
    %11 = vector.broadcast %9 : vector<1x32xf32> to vector<8x32xf32>
    %12 = arith.addf %10, %11 : vector<8x32xf32>
    %cst_8 = arith.constant 0.000000e+00 : f32
    %13 = vector.broadcast %cst_8 : f32 to vector<8x32xf32>
    %14 = arith.maximumf %12, %13 : vector<8x32xf32>
    %c40 = arith.constant 40 : index
    %c0_9 = arith.constant 0 : index
    %15 = vector.load %arg2[%c40, %c0_9] : memref<96x128xf32, #tpu.memory_space<vmem>>, vector<32x128xf32>
    %c88 = arith.constant 88 : index
    %c0_10 = arith.constant 0 : index
    %16 = vector.load %arg2[%c88, %c0_10] : memref<96x128xf32, #tpu.memory_space<vmem>>, vector<1x128xf32>
    %cst_11 = arith.constant dense<0.000000e+00> : vector<8x128xf32>
    %17 = tpu.matmul %14, %15, %cst_11 {dimension_numbers = #tpu.dot_dimension_numbers<[1], [0], [0], [1], [0, 0, 1, 1], [], []>} : vector<8x32xf32>, vector<32x128xf32>, vector<8x128xf32> -> vector<8x128xf32>
    %18 = vector.broadcast %16 : vector<1x128xf32> to vector<8x128xf32>
    %19 = arith.addf %17, %18 : vector<8x128xf32>
    %20 = tpu.iota {dimensions = array<i32: 1>} : vector<8x128xi32>
    %c2_i32 = arith.constant 2 : i32
    %21 = vector.broadcast %c2_i32 : i32 to vector<8x128xi32>
    %22 = arith.cmpi slt, %20, %21 : vector<8x128xi32>
    %cst_12 = arith.constant -1.000000e+30 : f32
    %23 = vector.broadcast %cst_12 : f32 to vector<8x128xf32>
    %24 = arith.select %22, %19, %23 : vector<8x128xi1>, vector<8x128xf32>
    %cst_13 = arith.constant dense<0xFF800000> : vector<8xf32>
    %25 = vector.multi_reduction <maximumf>, %24, %cst_13 [1] : vector<8x128xf32> to vector<8xf32>
    %26 = vector.shape_cast %25 : vector<8xf32> to vector<8x1xf32>
    %27 = vector.broadcast %26 : vector<8x1xf32> to vector<8x128xf32>
    %28 = arith.subf %24, %27 : vector<8x128xf32>
    %29 = math.exp %28 : vector<8x128xf32>
    %cst_14 = arith.constant dense<0.000000e+00> : vector<8xf32>
    %30 = vector.multi_reduction <add>, %29, %cst_14 [1] : vector<8x128xf32> to vector<8xf32>
    %31 = vector.shape_cast %30 : vector<8xf32> to vector<8x1xf32>
    %32 = vector.broadcast %31 : vector<8x1xf32> to vector<8x128xf32>
    %33 = arith.divf %29, %32 : vector<8x128xf32>
    %c0_15 = arith.constant 0 : index
    %c0_16 = arith.constant 0 : index
    %34 = vector.load %arg3[%c0_15, %c0_16] : memref<8x128xf32, #tpu.memory_space<vmem>>, vector<8x128xf32>
    tpu.vector_store %arg3[%c0_15, %c0_16], %33 {strides = array<i32>} : memref<8x128xf32, #tpu.memory_space<vmem>>, vector<8x128xf32>,
    return
  }
  func.func @transform_0(%arg0: i32) -> (i32, i32) {
    %c0_i32 = arith.constant 0 : i32
    %c0_i32_0 = arith.constant 0 : i32
    return %arg0, %c0_i32 : i32, i32
  }
  func.func @transform_1(%arg0: i32) -> (i32, i32) {
    %c0_i32 = arith.constant 0 : i32
    %c0_i32_0 = arith.constant 0 : i32
    %c0_i32_1 = arith.constant 0 : i32
    return %c0_i32, %c0_i32_0 : i32, i32
  }
  func.func @transform_2(%arg0: i32) -> (i32, i32) {
    %c0_i32 = arith.constant 0 : i32
    %c0_i32_0 = arith.constant 0 : i32
    return %arg0, %c0_i32 : i32, i32
  }
}

</mosaic_0001>

<llo_original>
// kernel: forward.1
$region0: #{forward.1}
  #allocation0 [shape = 'u32[]', space=smem, size = 0x4, offset = 0x4, fixed_abs, tag = 'smem constant byte address 0x4 - core index']
  #allocation1 [shape = 'u32[144,128]{1,0:T(1,128)}', space=vmem, size = 0x12000, scoped, tag = 'internal scratch']
  %s0 = inlined_call_operand.vmem [shape: f32[8,4], index: 0, kind: input, shape index: {}]
  %s1 = inlined_call_operand.hbm [shape: f32[96,128], index: 1, kind: input, shape index: {}]
  %s2 = inlined_call_operand.vmem [shape: f32[8,128], index: 2, kind: output, shape index: {}]
  %s3 = sld [smem:[#allocation0]]
  $region22: #{forward.1} parent=0
    _
  %s5 = ssub.s32 1, %s3
  %s6 = scalar_select 0, %s5, %s3
  $region1: #{forward.1} parent=0
    #allocation2 [shape = 'u8[49152]{0}', space=vmem, size = 0xc000, scoped, tag = 'input window, operand 1, single buffered']
    #allocation3 [shape = 's32[1]{0}', space=sflag, size = 0x4, scoped, tag = 'scoped memory for forward.1']
    %7 = vsyncpa [#allocation3], 0
    // Predicated region
    $region2: #{forward.1} parent=1 // pred_check
      _
    $region3: #{forward.1} parent=1 // pred_check_branch
      %9 = sbr.rel (0) target = $region5
    $region4: #{forward.1} parent=1 // pred_region
      _
    $region5: #{forward.1} parent=1 // pred_fallthru
      _
    // Predicated region
    $region6: #{forward.1} parent=1 // pred_check
      _
    $region7: #{forward.1} parent=1 // pred_check_branch
      %11 = sbr.rel (0) target = $region9
    $region8: #{forward.1} parent=1 // pred_region
      %s13 = ssub.s32 1536, 1536
      %14 = vsyncadd [#allocation3], %s13
      %s15 = sshll.u32 [#allocation2], 4
      %s16 = int_to_ptr.vmem [resolvable:$true] %s15
      %21 = dma.hbm_to_vmem [thread:$0]  %s1, 1536, %s16, [#allocation3], 128, 128, 8
    $region9: #{forward.1} parent=1 // pred_fallthru
      _
    // Predicated region
    $region10: #{forward.1} parent=1 // pred_check
      _
    $region11: #{forward.1} parent=1 // pred_check_branch
      %23 = sbr.rel (0) target = $region13
    $region12: #{forward.1} parent=1 // pred_region
      %24 = dma.done [#allocation3], 1536
    $region13: #{forward.1} parent=1 // pred_fallthru
      _
    %v25 = vld [vmem:[%s0] sm:$0xff]
    %v26 = vld [vmem:[#allocation2] sm:$0xf]
    %v27 = vld [vmem:[#allocation2 + $0x48] sm:$0x1]
    %v28 = vlaneseq
    %v29 = vshrl.u32 %v28, 7
    %v30 = vsub.s32 0, %v29
    %v31 = vrot.slane %v27, %v30
    %vm32 = vcmask 31744
    %v34 = vsel %vm32, %v25, 0
    %vm36 = vcmask 1043456
    %v38 = vsel %vm36, %v26, 0
    %40 = vmatprep.subr.mxu0 0.0
    %41 = vmatpush1.msra.mxu0 %v38
    %42 = vmatprep.subr.mxu0 0.0
    %43 = vmatpush1.msra.mxu0 0.0
    %44 = vmatprep.subr.mxu0 0.0
    %45 = vmatpush1.msra.mxu0 0.0
    %46 = vmatprep.subr.mxu0 0.0
    %47 = vmatpush1.msra.mxu0 0.0
    %48 = vmatprep.subr.mxu0 0.0
    %49 = vmatpush1.msra.mxu0 0.0
    %50 = vmatprep.subr.mxu0 0.0
    %51 = vmatpush1.msra.mxu0 0.0
    %52 = vmatprep.subr.mxu0 0.0
    %53 = vmatpush1.msra.mxu0 0.0
    %54 = vmatprep.subr.mxu0 0.0
    %55 = vmatpush1.msra.mxu0 0.0
    %56 = vmatprep.subr.mxu0 0.0
    %57 = vmatpush1.msra.mxu0 0.0
    %58 = vmatprep.subr.mxu0 0.0
    %59 = vmatpush1.msra.mxu0 0.0
    %60 = vmatprep.subr.mxu0 0.0
    %61 = vmatpush1.msra.mxu0 0.0
    %62 = vmatprep.subr.mxu0 0.0
    %63 = vmatpush1.msra.mxu0 0.0
    %64 = vmatprep.subr.mxu0 0.0
    %65 = vmatpush1.msra.mxu0 0.0
    %66 = vmatprep.subr.mxu0 0.0
    %67 = vmatpush1.msra.mxu0 0.0
    %68 = vmatprep.subr.mxu0 0.0
    %69 = vmatpush1.msra.mxu0 0.0
    %70 = vmatprep.subr.mxu0 0.0
    %71 = vmatpush1.msra.mxu0 0.0
    %72 = vmatprep.subr.mxu0 0.0
    %73 = vmatpush1.msra.mxu0 0.0
    %74 = vmatprep.subr.mxu0 0.0
    %75 = vmatpush1.msra.mxu0 0.0
    %76 = vmatprep.subr.mxu0 0.0
    %77 = vmatpush1.msra.mxu0 0.0
    %78 = vmatprep.subr.mxu0 0.0
    %79 = vmatpush1.msra.mxu0 0.0
    %80 = vmatprep.subr.mxu0 0.0
    %81 = vmatpush1.msra.mxu0 0.0
    %82 = vmatprep.subr.mxu0 0.0
    %83 = vmatpush1.msra.mxu0 0.0
    %84 = vmatprep.subr.mxu0 0.0
    %85 = vmatpush1.msra.mxu0 0.0
    %86 = vmatprep.subr.mxu0 0.0
    %87 = vmatpush1.msra.mxu0 0.0
    %88 = vmatprep.subr.mxu0 0.0
    %89 = vmatpush1.msra.mxu0 0.0
    %90 = vmatprep.subr.mxu0 0.0
    %91 = vmatpush1.msra.mxu0 0.0
    %92 = vmatprep.subr.mxu0 0.0
    %93 = vmatpush1.msra.mxu0 0.0
    %94 = vmatprep.subr.mxu0 0.0
    %95 = vmatpush1.msra.mxu0 0.0
    %96 = vmatprep.subr.mxu0 0.0
    %97 = vmatpush1.msra.mxu0 0.0
    %98 = vmatprep.subr.mxu0 0.0
    %99 = vmatpush1.msra.mxu0 0.0
    %100 = vmatprep.subr.mxu0 0.0
    %101 = vmatpush1.msra.mxu0 0.0
    %102 = vmatprep.subr.mxu0 0.0
    %103 = vmatpush1.msra.mxu0 0.0
    %104 = vmatprep.mubr.f32.mxu0 0.0
    %105 = vmatmul.mubr.f32.gmra.mrb[0].mxu0 %v34
    %v106 = vpop.f32.mrb[0].mxu0
    %v107 = vadd.f32 %v31, %v106
    %v108 = vpop.f32.mrb[0].mxu0
    %109 = vdwg.mxu0
    %v110 = vmax.f32 %v107, 0.0
    %v111 = vld [vmem:[#allocation2 + $0x8] sm:$0xff]
    %v112 = vld [vmem:[#allocation2 + $0x10] sm:$0xff]
    %v113 = vld [vmem:[#allocation2 + $0x18] sm:$0xff]
    %v114 = vld [vmem:[#allocation2 + $0x20] sm:$0xff]
    %v115 = vld [vmem:[#allocation2 + $0x50] sm:$0x1]
    %v116 = vlaneseq
    %v117 = vshrl.u32 %v116, 7
    %v118 = vsub.s32 0, %v117
    %v119 = vrot.slane %v115, %v118
    %vm120 = vcmask 261120
    %v122 = vsel %vm120, %v110, 0
    %124 = vmatprep.subr.mxu0 0.0
    %125 = vmatpush1.msra.mxu0 %v111
    %126 = vmatprep.subr.mxu0 0.0
    %127 = vmatpush1.msra.mxu0 %v112
    %128 = vmatprep.subr.mxu0 0.0
    %129 = vmatpush1.msra.mxu0 %v113
    %130 = vmatprep.subr.mxu0 0.0
    %131 = vmatpush1.msra.mxu0 %v114
    %132 = vmatprep.subr.mxu0 0.0
    %133 = vmatpush1.msra.mxu0 0.0
    %134 = vmatprep.subr.mxu0 0.0
    %135 = vmatpush1.msra.mxu0 0.0
    %136 = vmatprep.subr.mxu0 0.0
    %137 = vmatpush1.msra.mxu0 0.0
    %138 = vmatprep.subr.mxu0 0.0
    %139 = vmatpush1.msra.mxu0 0.0
    %140 = vmatprep.subr.mxu0 0.0
    %141 = vmatpush1.msra.mxu0 0.0
    %142 = vmatprep.subr.mxu0 0.0
    %143 = vmatpush1.msra.mxu0 0.0
    %144 = vmatprep.subr.mxu0 0.0
    %145 = vmatpush1.msra.mxu0 0.0
    %146 = vmatprep.subr.mxu0 0.0
    %147 = vmatpush1.msra.mxu0 0.0
    %148 = vmatprep.subr.mxu0 0.0
    %149 = vmatpush1.msra.mxu0 0.0
    %150 = vmatprep.subr.mxu0 0.0
    %151 = vmatpush1.msra.mxu0 0.0
    %152 = vmatprep.subr.mxu0 0.0
    %153 = vmatpush1.msra.mxu0 0.0
    %154 = vmatprep.subr.mxu0 0.0
    %155 = vmatpush1.msra.mxu0 0.0
    %156 = vmatprep.subr.mxu0 0.0
    %157 = vmatpush1.msra.mxu0 0.0
    %158 = vmatprep.subr.mxu0 0.0
    %159 = vmatpush1.msra.mxu0 0.0
    %160 = vmatprep.subr.mxu0 0.0
    %161 = vmatpush1.msra.mxu0 0.0
    %162 = vmatprep.subr.mxu0 0.0
    %163 = vmatpush1.msra.mxu0 0.0
    %164 = vmatprep.subr.mxu0 0.0
    %165 = vmatpush1.msra.mxu0 0.0
    %166 = vmatprep.subr.mxu0 0.0
    %167 = vmatpush1.msra.mxu0 0.0
    %168 = vmatprep.subr.mxu0 0.0
    %169 = vmatpush1.msra.mxu0 0.0
    %170 = vmatprep.subr.mxu0 0.0
    %171 = vmatpush1.msra.mxu0 0.0
    %172 = vmatprep.subr.mxu0 0.0
    %173 = vmatpush1.msra.mxu0 0.0
    %174 = vmatprep.subr.mxu0 0.0
    %175 = vmatpush1.msra.mxu0 0.0
    %176 = vmatprep.subr.mxu0 0.0
    %177 = vmatpush1.msra.mxu0 0.0
    %178 = vmatprep.subr.mxu0 0.0
    %179 = vmatpush1.msra.mxu0 0.0
    %180 = vmatprep.subr.mxu0 0.0
    %181 = vmatpush1.msra.mxu0 0.0
    %182 = vmatprep.subr.mxu0 0.0
    %183 = vmatpush1.msra.mxu0 0.0
    %184 = vmatprep.subr.mxu0 0.0
    %185 = vmatpush1.msra.mxu0 0.0
    %186 = vmatprep.subr.mxu0 0.0
    %187 = vmatpush1.msra.mxu0 0.0
    %188 = vmatprep.mubr.f32.mxu0 0.0
    %189 = vmatmul.mubr.f32.gmra.mrb[0].mxu0 %v122
    %v190 = vpop.f32.mrb[0].mxu0
    %v191 = vadd.f32 %v119, %v190
    %v192 = vpop.f32.mrb[0].mxu0
    %193 = vdwg.mxu0
    %v194 = vmax.f32 %v191, 0.0
    %v195 = vld [vmem:[#allocation2 + $0x28] sm:$0xff]
    %v196 = vld [vmem:[#allocation2 + $0x30] sm:$0xff]
    %v197 = vld [vmem:[#allocation2 + $0x38] sm:$0xff]
    %v198 = vld [vmem:[#allocation2 + $0x40] sm:$0xff]
    %v199 = vld [vmem:[#allocation2 + $0x58] sm:$0x1]
    %v200 = vlaneseq
    %v201 = vshrl.u32 %v200, 7
    %v202 = vsub.s32 0, %v201
    %v203 = vrot.slane %v199, %v202
    %v205 = vsel %vm120, %v194, 0
    %207 = vmatprep.subr.mxu0 0.0
    %208 = vmatpush1.msra.mxu0 %v195
    %209 = vmatprep.subr.mxu0 0.0
    %210 = vmatpush1.msra.mxu0 %v196
    %211 = vmatprep.subr.mxu0 0.0
    %212 = vmatpush1.msra.mxu0 %v197
    %213 = vmatprep.subr.mxu0 0.0
    %214 = vmatpush1.msra.mxu0 %v198
    %215 = vmatprep.subr.mxu0 0.0
    %216 = vmatpush1.msra.mxu0 0.0
    %217 = vmatprep.subr.mxu0 0.0
    %218 = vmatpush1.msra.mxu0 0.0
    %219 = vmatprep.subr.mxu0 0.0
    %220 = vmatpush1.msra.mxu0 0.0
    %221 = vmatprep.subr.mxu0 0.0
    %222 = vmatpush1.msra.mxu0 0.0
    %223 = vmatprep.subr.mxu0 0.0
    %224 = vmatpush1.msra.mxu0 0.0
    %225 = vmatprep.subr.mxu0 0.0
    %226 = vmatpush1.msra.mxu0 0.0
    %227 = vmatprep.subr.mxu0 0.0
    %228 = vmatpush1.msra.mxu0 0.0
    %229 = vmatprep.subr.mxu0 0.0
    %230 = vmatpush1.msra.mxu0 0.0
    %231 = vmatprep.subr.mxu0 0.0
    %232 = vmatpush1.msra.mxu0 0.0
    %233 = vmatprep.subr.mxu0 0.0
    %234 = vmatpush1.msra.mxu0 0.0
    %235 = vmatprep.subr.mxu0 0.0
    %236 = vmatpush1.msra.mxu0 0.0
    %237 = vmatprep.subr.mxu0 0.0
    %238 = vmatpush1.msra.mxu0 0.0
    %239 = vmatprep.subr.mxu0 0.0
    %240 = vmatpush1.msra.mxu0 0.0
    %241 = vmatprep.subr.mxu0 0.0
    %242 = vmatpush1.msra.mxu0 0.0
    %243 = vmatprep.subr.mxu0 0.0
    %244 = vmatpush1.msra.mxu0 0.0
    %245 = vmatprep.subr.mxu0 0.0
    %246 = vmatpush1.msra.mxu0 0.0
    %247 = vmatprep.subr.mxu0 0.0
    %248 = vmatpush1.msra.mxu0 0.0
    %249 = vmatprep.subr.mxu0 0.0
    %250 = vmatpush1.msra.mxu0 0.0
    %251 = vmatprep.subr.mxu0 0.0
    %252 = vmatpush1.msra.mxu0 0.0
    %253 = vmatprep.subr.mxu0 0.0
    %254 = vmatpush1.msra.mxu0 0.0
    %255 = vmatprep.subr.mxu0 0.0
    %256 = vmatpush1.msra.mxu0 0.0
    %257 = vmatprep.subr.mxu0 0.0
    %258 = vmatpush1.msra.mxu0 0.0
    %259 = vmatprep.subr.mxu0 0.0
    %260 = vmatpush1.msra.mxu0 0.0
    %261 = vmatprep.subr.mxu0 0.0
    %262 = vmatpush1.msra.mxu0 0.0
    %263 = vmatprep.subr.mxu0 0.0
    %264 = vmatpush1.msra.mxu0 0.0
    %265 = vmatprep.subr.mxu0 0.0
    %266 = vmatpush1.msra.mxu0 0.0
    %267 = vmatprep.subr.mxu0 0.0
    %268 = vmatpush1.msra.mxu0 0.0
    %269 = vmatprep.subr.mxu0 0.0
    %270 = vmatpush1.msra.mxu0 0.0
    %271 = vmatprep.mubr.f32.mxu0 0.0
    %272 = vmatmul.mubr.f32.gmra.mrb[0].mxu0 %v205
    %v273 = vpop.f32.mrb[0].mxu0
    %v274 = vadd.f32 %v203, %v273
    %v275 = vpop.f32.mrb[0].mxu0
    %276 = vdwg.mxu0
    %v277 = vlaneseq
    %v278 = vand.u32 %v277, 127
    %vm279 = vcmp.lt.s32.totalorder %v278, 2
    %v280 = vsel %vm279, %v274, -1e+30
    %281 = vmax.xlane.f32.xlu0 %v280
    %v282 = vpop.xlane.xlu0 %281
    %v283 = vsub.f32 %v280, %v282
    %v284 = vmul.f32 %v283, 1.442695
    %v285 = vpow.pop %v284
    %286 = vadd.xlane.f32.xlu0 %v285
    %v287 = vpop.xlane.xlu0 %286
    %v288 = vrcp.pop %v287
    %v289 = vmul.f32 %v285, %v288
    %290 = vst [vmem:[%s2] sm:$0xff] %v289
    // Predicated region
    $region14: #{forward.1} parent=1 // pred_check
      _
    $region15: #{forward.1} parent=1 // pred_check_branch
      %292 = sbr.rel (0) target = $region17
    $region16: #{forward.1} parent=1 // pred_region
      _
    $region17: #{forward.1} parent=1 // pred_fallthru
      _
    // Predicated region
    $region18: #{forward.1} parent=1 // pred_check
      _
    $region19: #{forward.1} parent=1 // pred_check_branch
      %294 = sbr.rel (0) target = $region21
    $region20: #{forward.1} parent=1 // pred_region
      _
    $region21: #{forward.1} parent=1 // pred_fallthru
      _
    %295 = vsyncpa [#allocation3], 1

</llo_original>
